<compile_context>
chip_gen: v7x
topology: tpu7x:2x2x1
jax: 0.10.0
libtpu: 0.0.40
codegen_flags: <defaults>
</compile_context>

<pallas_src>
import jax
import jax.numpy as jnp
from jax.experimental import pallas as pl
from jax.experimental.pallas import tpu as pltpu


def _round_up(x, m):
    return ((x + m - 1) // m) * m


def decoder_kernel(flag_ref, text_ref, obj_ref, wv_ref, bv_ref, wh_ref, bh_ref,
                   out_ref, dec_ref):
    # Hoisted: the grid-invariant visual2hid + gate + broadcast-add runs only on
    # the first vocab tile of each M block and is cached in VMEM scratch.
    @pl.when(pl.program_id(1) == 0)
    def _():
        # visual2hid on the (pre-averaged, per-row) object features: [tm, H]
        o_h = (jnp.dot(obj_ref[...], wv_ref[...],
                       preferred_element_type=jnp.float32) + bv_ref[...])
        # flag==0 rows reproduce the torch.zeros(1,1,H) "no object" branch.
        dec = text_ref[...] + o_h * flag_ref[...]
        dec_ref[...] = dec.astype(dec_ref.dtype)

    # hid2vocab tile: [tm, H] @ [H, tv] in bf16 with f32 accumulation.
    out_ref[...] = (jnp.dot(dec_ref[...], wh_ref[...],
                            preferred_element_type=jnp.float32)
                    + bh_ref[...]).astype(out_ref.dtype)


def decoder_head(text, obj_feat, flags, wv, bv, wh, bh, *, tm=256, tv=512):
    """Fused decoder head for ALL dialogues at once.

    text:     [M, H]   flattened (B*T) text hidden states, f32
    obj_feat: [M, Hi]  per-row object-mean features (pre-broadcast over T), f32
    flags:    [M, 1]   1.0 where the dialogue has object features, else 0.0
    wv,bv:    visual2hid (pre-transposed [Hi, H] / [1, H]), f32
    wh,bh:    hid2vocab  (pre-transposed [H, V] bf16 / [1, V] f32)
    returns:  [M, V] f32 logits
    """
    M, H = text.shape
    Hi = obj_feat.shape[1]
    V = wh.shape[1]

    tm = min(tm, _round_up(M, 16))      # sublane-aligned (bf16 scratch)
    tv = min(tv, _round_up(V, 128))     # lane-aligned vocab tile
    M_pad = _round_up(M, tm)
    V_pad = _round_up(V, tv)

    if M_pad != M:
        pad = M_pad - M
        text = jnp.pad(text, ((0, pad), (0, 0)))
        obj_feat = jnp.pad(obj_feat, ((0, pad), (0, 0)))
        flags = jnp.pad(flags, ((0, pad), (0, 0)))
    if V_pad != V:
        pad = V_pad - V
        wh = jnp.pad(wh, ((0, 0), (0, pad)))
        bh = jnp.pad(bh, ((0, 0), (0, pad)))

    out = pl.pallas_call(
        decoder_kernel,
        out_shape=jax.ShapeDtypeStruct((M_pad, V_pad), jnp.float32),
        grid=(M_pad // tm, V_pad // tv),
        in_specs=[
            pl.BlockSpec((tm, 1), lambda m, j: (m, 0)),     # has-object flags
            pl.BlockSpec((tm, H), lambda m, j: (m, 0)),     # text hidden states
            pl.BlockSpec((tm, Hi), lambda m, j: (m, 0)),    # object mean feats
            pl.BlockSpec((Hi, H), lambda m, j: (0, 0)),     # visual2hid W^T
            pl.BlockSpec((1, H), lambda m, j: (0, 0)),      # visual2hid b
            pl.BlockSpec((H, tv), lambda m, j: (0, j)),     # hid2vocab W^T tile
            pl.BlockSpec((1, tv), lambda m, j: (0, j)),     # hid2vocab b tile
        ],
        out_specs=pl.BlockSpec((tm, tv), lambda m, j: (m, j)),
        scratch_shapes=[pltpu.VMEM((tm, H), jnp.bfloat16)],  # hoisted dec
        compiler_params=pltpu.CompilerParams(
            dimension_semantics=("parallel", "arbitrary")),
    )(flags, text, obj_feat, wv, bv, wh, bh)

    return out[:M, :V]


class BaseModelPallas:
    """Decoder head of BaseModel (visual2hid + object mean + add + hid2vocab)."""

    def __init__(self, h_img, h_text, vocab_size, key):
        # TODO(synk): GPT2Model / DeiTModel backbones (pretrained checkpoints)
        # are not reproducible in-kernel; their hidden states are inputs here.
        k1, k2, k3, k4 = jax.random.split(key, 4)
        # nn.Linear stores [out, in]; keep pre-transposed [in, out] for x @ W.
        self.wv = jax.random.normal(k1, (h_img, h_text), jnp.float32) / jnp.sqrt(h_img)
        self.bv = jax.random.normal(k2, (1, h_text), jnp.float32) / jnp.sqrt(h_img)
        # hid2vocab weight stored bf16: halves the dominant HBM stream.
        self.wh = (jax.random.normal(k3, (h_text, vocab_size), jnp.float32)
                   / jnp.sqrt(h_text)).astype(jnp.bfloat16)
        self.bh = jax.random.normal(k4, (1, vocab_size), jnp.float32) / jnp.sqrt(h_text)
        self.h_img = h_img
        self.h_text = h_text
        self.vocab_size = vocab_size

    def forward(self, batch_text_logits, batch_obj_features, use_object):
        # All dialogues fused into ONE pallas_call (no per-element launches, the
        # hid2vocab weight streams from HBM once, MXU M-dim = B*T).
        # TODO(synk): dialogues with different sequence lengths would need
        # padding to a common T; the demo uses equal T per dialogue.
        B = len(batch_text_logits)
        T = batch_text_logits[0].shape[0]
        text = jnp.concatenate(list(batch_text_logits), axis=0)        # [B*T, H]

        obj_rows, flag_rows = [], []
        for obj_feat in batch_obj_features:
            has_obj = use_object and (obj_feat is not None)
            if has_obj:
                # mean over objects commutes with the linear visual2hid layer,
                # so only the [1, Hi] mean feature needs to enter the kernel.
                mean_feat = jnp.mean(obj_feat, axis=0, keepdims=True)   # [1, Hi]
                flag = 1.0
            else:
                mean_feat = jnp.zeros((1, self.h_img), jnp.float32)
                flag = 0.0
            obj_rows.append(jnp.broadcast_to(mean_feat, (T, self.h_img)))
            flag_rows.append(jnp.full((T, 1), flag, jnp.float32))
        obj_b = jnp.concatenate(obj_rows, axis=0)                       # [B*T, Hi]
        flag_b = jnp.concatenate(flag_rows, axis=0)                     # [B*T, 1]

        logits = decoder_head(text, obj_b, flag_b,
                              self.wv, self.bv, self.wh, self.bh)       # [B*T, V]
        logits = logits.reshape(B, T, self.vocab_size)
        return [logits[b] for b in range(B)]


def _reference(text_logits, obj_feat, wv, bv, wh, bh, has_obj):
    """Plain-JAX mirror of the PyTorch decoder path (f32 end-to-end)."""
    H = wv.shape[1]
    if has_obj:
        o_h = obj_feat @ wv + bv                        # [N, H]
        obj_mean = jnp.mean(o_h, axis=0, keepdims=True)  # [1, H]
    else:
        obj_mean = jnp.zeros((1, H), jnp.float32)
    dec = text_logits + obj_mean                         # broadcast over T
    return dec @ wh.astype(jnp.float32) + bh


if __name__ == "__main__":
    key = jax.random.PRNGKey(0)
    k_model, k_t0, k_t1, k_o0 = jax.random.split(key, 4)

    H_IMG, H_TEXT, VOCAB, T, N_OBJ = 64, 128, 1024, 8, 4

    model = BaseModelPallas(H_IMG, H_TEXT, VOCAB, k_model)

    # Batch of two dialogues: one with object features, one without.
    text0 = jax.random.normal(k_t0, (T, H_TEXT), jnp.float32)
    text1 = jax.random.normal(k_t1, (T, H_TEXT), jnp.float32)
    obj0 = jax.random.normal(k_o0, (N_OBJ, H_IMG), jnp.float32)

    outs = model.forward([text0, text1], [obj0, None], use_object=True)
    outs = [jax.block_until_ready(o) for o in outs]

    # Correctness check against the plain-JAX reference (bf16 wh stream in the
    # kernel -> slightly looser tolerance than pure f32).
    ref0 = _reference(text0, obj0, model.wv, model.bv, model.wh, model.bh, True)
    ref1 = _reference(text1, None, model.wv, model.bv, model.wh, model.bh, False)
    assert outs[0].shape == (T, VOCAB) and outs[1].shape == (T, VOCAB)
    assert jnp.allclose(outs[0], ref0, atol=3e-2, rtol=3e-2)
    assert jnp.allclose(outs[1], ref1, atol=3e-2, rtol=3e-2)

    print("KERNEL_OK")
</pallas_src>

<mosaic_0001>
module attributes {stable_mosaic.version = 11 : i64} {
  func.func @decoder_kernel(%arg0: i32, %arg1: i32, %arg2: memref<16x1xf32, #tpu.memory_space<vmem>>, %arg3: memref<16x128xf32, #tpu.memory_space<vmem>>, %arg4: memref<16x64xf32, #tpu.memory_space<vmem>>, %arg5: memref<64x128xf32, #tpu.memory_space<vmem>>, %arg6: memref<1x128xf32, #tpu.memory_space<vmem>>, %arg7: memref<128x512xbf16, #tpu.memory_space<vmem>>, %arg8: memref<1x512xf32, #tpu.memory_space<vmem>>, %arg9: memref<16x512xf32, #tpu.memory_space<vmem>>, %arg10: memref<16x128xbf16, #tpu.memory_space<vmem>>) attributes {dimension_semantics = [#tpu.dimension_semantics<parallel>, #tpu.dimension_semantics<arbitrary>], iteration_bounds = array<i64: 1, 2>, scalar_prefetch = 0 : i64, scratch_operands = 1 : i64, tpu.core_type = #tpu.core_type<tc>, window_params = [{transform_indices = @transform_0, window_bounds = array<i64: 16, 1>}, {transform_indices = @transform_1, window_bounds = array<i64: 16, 128>}, {transform_indices = @transform_2, window_bounds = array<i64: 16, 64>}, {pipeline_mode = #tpu.pipeline_mode<synchronous>, transform_indices = @transform_3, window_bounds = array<i64: 64, 128>}, {pipeline_mode = #tpu.pipeline_mode<synchronous>, transform_indices = @transform_4, window_bounds = array<i64: 1, 128>}, {transform_indices = @transform_5, window_bounds = array<i64: 128, 512>}, {transform_indices = @transform_6, window_bounds = array<i64: 1, 512>}, {transform_indices = @transform_7, window_bounds = array<i64: 16, 512>}]} {
    %c0_i32 = arith.constant 0 : i32
    %0 = arith.cmpi eq, %arg1, %c0_i32 : i32
    %1 = arith.extui %0 : i1 to i32
    %c0_i32_0 = arith.constant 0 : i32
    %2 = arith.cmpi ne, %1, %c0_i32_0 : i32
    scf.if %2 {
      %c0_8 = arith.constant 0 : index
      %c0_9 = arith.constant 0 : index
      %10 = vector.load %arg4[%c0_8, %c0_9] : memref<16x64xf32, #tpu.memory_space<vmem>>, vector<16x64xf32>
      %c0_10 = arith.constant 0 : index
      %c0_11 = arith.constant 0 : index
      %11 = vector.load %arg5[%c0_10, %c0_11] : memref<64x128xf32, #tpu.memory_space<vmem>>, vector<64x128xf32>
      %cst_12 = arith.constant dense<0.000000e+00> : vector<16x128xf32>
      %12 = tpu.matmul %10, %11, %cst_12 {dimension_numbers = #tpu.dot_dimension_numbers<[1], [0], [0], [1], [0, 0, 1, 1], [], []>} : vector<16x64xf32>, vector<64x128xf32>, vector<16x128xf32> -> vector<16x128xf32>
      %c0_13 = arith.constant 0 : index
      %c0_14 = arith.constant 0 : index
      %13 = vector.load %arg6[%c0_13, %c0_14] : memref<1x128xf32, #tpu.memory_space<vmem>>, vector<1x128xf32>
      %14 = vector.broadcast %13 : vector<1x128xf32> to vector<16x128xf32>
      %15 = arith.addf %12, %14 : vector<16x128xf32>
      %c0_15 = arith.constant 0 : index
      %c0_16 = arith.constant 0 : index
      %16 = vector.load %arg3[%c0_15, %c0_16] : memref<16x128xf32, #tpu.memory_space<vmem>>, vector<16x128xf32>
      %c0_17 = arith.constant 0 : index
      %c0_18 = arith.constant 0 : index
      %17 = vector.load %arg2[%c0_17, %c0_18] : memref<16x1xf32, #tpu.memory_space<vmem>>, vector<16x1xf32>
      %18 = vector.broadcast %17 : vector<16x1xf32> to vector<16x128xf32>
      %19 = arith.mulf %15, %18 : vector<16x128xf32>
      %20 = arith.addf %16, %19 : vector<16x128xf32>
      %21 = arith.truncf %20 : vector<16x128xf32> to vector<16x128xbf16>
      %c0_19 = arith.constant 0 : index
      %c0_20 = arith.constant 0 : index
      %22 = vector.load %arg10[%c0_19, %c0_20] : memref<16x128xbf16, #tpu.memory_space<vmem>>, vector<16x128xbf16>
      tpu.vector_store %arg10[%c0_19, %c0_20], %21 {strides = array<i32>} : memref<16x128xbf16, #tpu.memory_space<vmem>>, vector<16x128xbf16>,
    } else {
    }
    %c0 = arith.constant 0 : index
    %c0_1 = arith.constant 0 : index
    %3 = vector.load %arg10[%c0, %c0_1] : memref<16x128xbf16, #tpu.memory_space<vmem>>, vector<16x128xbf16>
    %c0_2 = arith.constant 0 : index
    %c0_3 = arith.constant 0 : index
    %4 = vector.load %arg7[%c0_2, %c0_3] : memref<128x512xbf16, #tpu.memory_space<vmem>>, vector<128x512xbf16>
    %cst = arith.constant dense<0.000000e+00> : vector<16x512xf32>
    %5 = tpu.matmul %3, %4, %cst {dimension_numbers = #tpu.dot_dimension_numbers<[1], [0], [0], [1], [0, 0, 1, 1], [], []>} : vector<16x128xbf16>, vector<128x512xbf16>, vector<16x512xf32> -> vector<16x512xf32>
    %c0_4 = arith.constant 0 : index
    %c0_5 = arith.constant 0 : index
    %6 = vector.load %arg8[%c0_4, %c0_5] : memref<1x512xf32, #tpu.memory_space<vmem>>, vector<1x512xf32>
    %7 = vector.broadcast %6 : vector<1x512xf32> to vector<16x512xf32>
    %8 = arith.addf %5, %7 : vector<16x512xf32>
    %c0_6 = arith.constant 0 : index
    %c0_7 = arith.constant 0 : index
    %9 = vector.load %arg9[%c0_6, %c0_7] : memref<16x512xf32, #tpu.memory_space<vmem>>, vector<16x512xf32>
    tpu.vector_store %arg9[%c0_6, %c0_7], %8 {strides = array<i32>} : memref<16x512xf32, #tpu.memory_space<vmem>>, vector<16x512xf32>,
    return
  }
  func.func @transform_0(%arg0: i32, %arg1: i32) -> (i32, i32) {
    %c0_i32 = arith.constant 0 : i32
    %c0_i32_0 = arith.constant 0 : i32
    return %arg0, %c0_i32 : i32, i32
  }
  func.func @transform_1(%arg0: i32, %arg1: i32) -> (i32, i32) {
    %c0_i32 = arith.constant 0 : i32
    %c0_i32_0 = arith.constant 0 : i32
    return %arg0, %c0_i32 : i32, i32
  }
  func.func @transform_2(%arg0: i32, %arg1: i32) -> (i32, i32) {
    %c0_i32 = arith.constant 0 : i32
    %c0_i32_0 = arith.constant 0 : i32
    return %arg0, %c0_i32 : i32, i32
  }
  func.func @transform_3(%arg0: i32, %arg1: i32) -> (i32, i32) {
    %c0_i32 = arith.constant 0 : i32
    %c0_i32_0 = arith.constant 0 : i32
    %c0_i32_1 = arith.constant 0 : i32
    return %c0_i32, %c0_i32_0 : i32, i32
  }
  func.func @transform_4(%arg0: i32, %arg1: i32) -> (i32, i32) {
    %c0_i32 = arith.constant 0 : i32
    %c0_i32_0 = arith.constant 0 : i32
    %c0_i32_1 = arith.constant 0 : i32
    return %c0_i32, %c0_i32_0 : i32, i32
  }
  func.func @transform_5(%arg0: i32, %arg1: i32) -> (i32, i32) {
    %c0_i32 = arith.constant 0 : i32
    %c0_i32_0 = arith.constant 0 : i32
    return %c0_i32, %arg1 : i32, i32
  }
  func.func @transform_6(%arg0: i32, %arg1: i32) -> (i32, i32) {
    %c0_i32 = arith.constant 0 : i32
    %c0_i32_0 = arith.constant 0 : i32
    return %c0_i32, %arg1 : i32, i32
  }
  func.func @transform_7(%arg0: i32, %arg1: i32) -> (i32, i32) {
    %c0_i32 = arith.constant 0 : i32
    return %arg0, %arg1 : i32, i32
  }
}

</mosaic_0001>

<llo_original>
// kernel: tpu_custom_call.1
$region0: #{tpu_custom_call.1}
  #allocation0 [shape = 'u32[]', space=smem, size = 0x4, offset = 0x4, fixed_abs, tag = 'smem constant byte address 0x4 - core index']
  #allocation1 [shape = 'u32[144,128]{1,0:T(1,128)}', space=vmem, size = 0x12000, scoped, tag = 'internal scratch']
  #allocation2 [shape = 'bf16[16,128]{1,0:T(16,128)(2,1)}', space=vmem, size = 0x1000, scoped, tag = 'scratch operand']
  %s0 = inlined_call_operand.vmem [shape: f32[16,1], index: 0, kind: input, shape index: {}]
  %s1 = inlined_call_operand.vmem [shape: f32[16,128], index: 1, kind: input, shape index: {}]
  %s2 = inlined_call_operand.hbm [shape: f32[16,64], index: 2, kind: input, shape index: {}]
  %s3 = inlined_call_operand.hbm [shape: f32[64,128], index: 3, kind: input, shape index: {}]
  %s4 = inlined_call_operand.vmem [shape: f32[1,128], index: 4, kind: input, shape index: {}]
  %s5 = inlined_call_operand.hbm [shape: bf16[128,1024], index: 5, kind: input, shape index: {}]
  %s6 = inlined_call_operand.vmem [shape: f32[1,1024], index: 6, kind: input, shape index: {}]
  %s7 = inlined_call_operand.hbm [shape: f32[16,1024], index: 7, kind: output, shape index: {}]
  %s8 = sld [smem:[#allocation0]]
  $region77: #{tpu_custom_call.1} parent=0
    _
  %s10 = ssub.s32 1, %s8
  %s11 = scalar_select 0, %s10, %s8
  $region1: #{tpu_custom_call.1} parent=0
    #allocation3 [shape = 'u8[8192]{0}', space=vmem, size = 0x2000, scoped, tag = 'input window, operand 2, single buffered']
    #allocation4 [shape = 's32[2]{0}', space=sflag, size = 0x8, scoped, tag = 'scoped memory for tpu_custom_call.1']
    #allocation5 [shape = 's32[2]{0}', space=sflag, size = 0x8, scoped, tag = 'scoped memory for tpu_custom_call.1']
    #allocation6 [shape = 'u8[32768]{0}', space=vmem, size = 0x8000, scoped, tag = 'input window, operand 3, single buffered']
    #allocation7 [shape = 's32[1]{0}', space=sflag, size = 0x4, scoped, tag = 'scoped memory for tpu_custom_call.1']
    #allocation8 [shape = 'u8[262144]{0}', space=vmem, size = 0x40000, scoped, tag = 'input window, operand 5']
    #allocation9 [shape = 'u8[65536]{0}', space=vmem, size = 0x10000, scoped, tag = 'output window, operand 0']
    %12 = vsyncpa [#allocation4], 0
    %13 = vsyncpa [#allocation7], 0
    %14 = vsyncpa [#allocation5], 0
    %s15 = scalar_lea.sflag [#allocation5], 1
    %16 = vsyncpa %s15, 0
    loop: start=0, step=1, limit=4
    $region2: #{tpu_custom_call.1} parent=1 // loop_pre_header
      _
    $region3: #{tpu_custom_call.1} parent=1 // loop_header
      %s18 = sphi 0, %s22
      %p19 = scmp.ge.s32.totalorder %s18, 4
      %s25 = sphi 0, %s37
      %s26 = sphi 0, %s33
      %s27 = sphi 0, %s25
      %s28 = sphi 0, %s26
      %s29 = sphi 0, %s27
      %s30 = sphi 0, %s28
      %s40 = sphi 0, %s42
      %s43 = sphi 0, %s40
      %s44 = sphi 0, %s43
      %s60 = sphi 0, %s44
      %s66 = sphi 0, %s68
      %s69 = sphi 0, %s66
      %s70 = sphi 0, %s69
      %s86 = sphi 0, %s70
      %s92 = sphi 0, %s94
      %s95 = sphi 0, %s92
      %s96 = sphi 0, %s95
      %s112 = sphi 0, %s96
      %s116 = sphi 0, %s116
      %s118 = sphi 0, %s116
      %s119 = sphi 0, %s118
      %s133 = sphi 0, %s119
      %s137 = sphi 0, %s137
      %s139 = sphi 0, %s137
      %s140 = sphi 0, %s139
      %s154 = sphi 0, %s140
      %s160 = sphi 0, %s162
      %s163 = sphi 0, %s160
      %s164 = sphi 0, %s163
      %s180 = sphi 0, %s164
      %s186 = sphi 0, %s188
      %s189 = sphi 0, %s186
      %s190 = sphi 0, %s189
      %s206 = sphi 0, %s190
      %s214 = sphi 0, %s216
      %s217 = sphi 0, %s214
      %s218 = sphi 0, %s217
      %s234 = sphi 0, %s218
    $region4: #{tpu_custom_call.1} parent=1 // loop_header_branch
      %21 = sbr.rel (%p19) target = $region8
    $region5: #{tpu_custom_call.1} parent=1 // loop_body
      %s23 = ssub.s32 %s18, 1
      %s24 = ssub.s32 %s18, 2
      %s31 = sadd.s32 1, %s26
      %p32 = scmp.ge.s32.totalorder %s31, 2
      %s33 = scalar_select %p32, 0, %s31
      %s34 = sadd.s32 1, %s25
      %s35 = scalar_select %p32, %s34, %s25
      %p36 = scmp.ge.s32.totalorder %s35, 1
      %s37 = scalar_select %p36, 0, %s35
      %s38 = ssub.s32 %s25, %s37
      %p39 = scmp.eq.s32.totalorder %s38, 0
      %s41 = sadd.s32 %s40, 1
      %s42 = scalar_select %p39, %s40, %s41
      %p45 = pneg %p39
      %p46 = scmp.eq.s32.totalorder %s18, 1
      %p47 = por %p45, %p46
      %p48 = scmp.ne.s32.totalorder %s40, %s43
      %p49 = scmp.eq.s32.totalorder %s18, 0
      %p50 = por %p48, %p49
      %p51 = scmp.ne.s32.totalorder %s40, %s43
      %p52 = scmp.eq.s32.totalorder %s23, 1
      %p53 = por %p51, %p52
      %p54 = scmp.ne.s32.totalorder %s43, %s44
      %p55 = scmp.eq.s32.totalorder %s23, 0
      %p56 = por %p54, %p55
      %p57 = scmp.ne.s32.totalorder %s43, %s44
      %p58 = scmp.eq.s32.totalorder %s24, 1
      %p59 = por %p57, %p58
      %p61 = scmp.ne.s32.totalorder %s44, %s60
      %p62 = scmp.eq.s32.totalorder %s24, 0
      %p63 = por %p61, %p62
      %s64 = ssub.s32 %s25, %s37
      %p65 = scmp.eq.s32.totalorder %s64, 0
      %s67 = sadd.s32 %s66, 1
      %s68 = scalar_select %p65, %s66, %s67
      %p71 = pneg %p65
      %p72 = scmp.eq.s32.totalorder %s18, 1
      %p73 = por %p71, %p72
      %p74 = scmp.ne.s32.totalorder %s66, %s69
      %p75 = scmp.eq.s32.totalorder %s18, 0
      %p76 = por %p74, %p75
      %p77 = scmp.ne.s32.totalorder %s66, %s69
      %p78 = scmp.eq.s32.totalorder %s23, 1
      %p79 = por %p77, %p78
      %p80 = scmp.ne.s32.totalorder %s69, %s70
      %p81 = scmp.eq.s32.totalorder %s23, 0
      %p82 = por %p80, %p81
      %p83 = scmp.ne.s32.totalorder %s69, %s70
      %p84 = scmp.eq.s32.totalorder %s24, 1
      %p85 = por %p83, %p84
      %p87 = scmp.ne.s32.totalorder %s70, %s86
      %p88 = scmp.eq.s32.totalorder %s24, 0
      %p89 = por %p87, %p88
      %s90 = ssub.s32 %s25, %s37
      %p91 = scmp.eq.s32.totalorder %s90, 0
      %s93 = sadd.s32 %s92, 1
      %s94 = scalar_select %p91, %s92, %s93
      %p97 = pneg %p91
      %p98 = scmp.eq.s32.totalorder %s18, 1
      %p99 = por %p97, %p98
      %p100 = scmp.ne.s32.totalorder %s92, %s95
      %p101 = scmp.eq.s32.totalorder %s18, 0
      %p102 = por %p100, %p101
      %p103 = scmp.ne.s32.totalorder %s92, %s95
      %p104 = scmp.eq.s32.totalorder %s23, 1
      %p105 = por %p103, %p104
      %p106 = scmp.ne.s32.totalorder %s95, %s96
      %p107 = scmp.eq.s32.totalorder %s23, 0
      %p108 = por %p106, %p107
      %p109 = scmp.ne.s32.totalorder %s95, %s96
      %p110 = scmp.eq.s32.totalorder %s24, 1
      %p111 = por %p109, %p110
      %p113 = scmp.ne.s32.totalorder %s96, %s112
      %p114 = scmp.eq.s32.totalorder %s24, 0
      %p115 = por %p113, %p114
      %s117 = sadd.s32 %s116, 1
      %p120 = scmp.eq.s32.totalorder %s18, 1
      %p121 = scmp.ne.s32.totalorder %s116, %s118
      %p122 = scmp.eq.s32.totalorder %s18, 0
      %p123 = por %p121, %p122
      %p124 = scmp.ne.s32.totalorder %s116, %s118
      %p125 = scmp.eq.s32.totalorder %s23, 1
      %p126 = por %p124, %p125
      %p127 = scmp.ne.s32.totalorder %s118, %s119
      %p128 = scmp.eq.s32.totalorder %s23, 0
      %p129 = por %p127, %p128
      %p130 = scmp.ne.s32.totalorder %s118, %s119
      %p131 = scmp.eq.s32.totalorder %s24, 1
      %p132 = por %p130, %p131
      %p134 = scmp.ne.s32.totalorder %s119, %s133
      %p135 = scmp.eq.s32.totalorder %s24, 0
      %p136 = por %p134, %p135
      %s138 = sadd.s32 %s137, 1
      %p141 = scmp.eq.s32.totalorder %s18, 1
      %p142 = scmp.ne.s32.totalorder %s137, %s139
      %p143 = scmp.eq.s32.totalorder %s18, 0
      %p144 = por %p142, %p143
      %p145 = scmp.ne.s32.totalorder %s137, %s139
      %p146 = scmp.eq.s32.totalorder %s23, 1
      %p147 = por %p145, %p146
      %p148 = scmp.ne.s32.totalorder %s139, %s140
      %p149 = scmp.eq.s32.totalorder %s23, 0
      %p150 = por %p148, %p149
      %p151 = scmp.ne.s32.totalorder %s139, %s140
      %p152 = scmp.eq.s32.totalorder %s24, 1
      %p153 = por %p151, %p152
      %p155 = scmp.ne.s32.totalorder %s140, %s154
      %p156 = scmp.eq.s32.totalorder %s24, 0
      %p157 = por %p155, %p156
      %s158 = ssub.s32 %s26, %s33
      %p159 = scmp.eq.s32.totalorder %s158, 0
      %s161 = sadd.s32 %s160, 1
      %s162 = scalar_select %p159, %s160, %s161
      %p165 = pneg %p159
      %p166 = scmp.eq.s32.totalorder %s18, 1
      %p167 = por %p165, %p166
      %p168 = scmp.ne.s32.totalorder %s160, %s163
      %p169 = scmp.eq.s32.totalorder %s18, 0
      %p170 = por %p168, %p169
      %p171 = scmp.ne.s32.totalorder %s160, %s163
      %p172 = scmp.eq.s32.totalorder %s23, 1
      %p173 = por %p171, %p172
      %p174 = scmp.ne.s32.totalorder %s163, %s164
      %p175 = scmp.eq.s32.totalorder %s23, 0
      %p176 = por %p174, %p175
      %p177 = scmp.ne.s32.totalorder %s163, %s164
      %p178 = scmp.eq.s32.totalorder %s24, 1
      %p179 = por %p177, %p178
      %p181 = scmp.ne.s32.totalorder %s164, %s180
      %p182 = scmp.eq.s32.totalorder %s24, 0
      %p183 = por %p181, %p182
      %s184 = ssub.s32 %s26, %s33
      %p185 = scmp.eq.s32.totalorder %s184, 0
      %s187 = sadd.s32 %s186, 1
      %s188 = scalar_select %p185, %s186, %s187
      %p191 = pneg %p185
      %p192 = scmp.eq.s32.totalorder %s18, 1
      %p193 = por %p191, %p192
      %p194 = scmp.ne.s32.totalorder %s186, %s189
      %p195 = scmp.eq.s32.totalorder %s18, 0
      %p196 = por %p194, %p195
      %p197 = scmp.ne.s32.totalorder %s186, %s189
      %p198 = scmp.eq.s32.totalorder %s23, 1
      %p199 = por %p197, %p198
      %p200 = scmp.ne.s32.totalorder %s189, %s190
      %p201 = scmp.eq.s32.totalorder %s23, 0
      %p202 = por %p200, %p201
      %p203 = scmp.ne.s32.totalorder %s189, %s190
      %p204 = scmp.eq.s32.totalorder %s24, 1
      %p205 = por %p203, %p204
      %p207 = scmp.ne.s32.totalorder %s190, %s206
      %p208 = scmp.eq.s32.totalorder %s24, 0
      %p209 = por %p207, %p208
      %s210 = ssub.s32 %s25, %s37
      %s211 = ssub.s32 %s26, %s33
      %s212 = sor.u32 %s210, %s211
      %p213 = scmp.eq.s32.totalorder %s212, 0
      %s215 = sadd.s32 %s214, 1
      %s216 = scalar_select %p213, %s214, %s215
      %p219 = pneg %p213
      %p220 = scmp.eq.s32.totalorder %s18, 1
      %p221 = por %p219, %p220
      %p222 = scmp.ne.s32.totalorder %s214, %s217
      %p223 = scmp.eq.s32.totalorder %s18, 0
      %p224 = por %p222, %p223
      %p225 = scmp.ne.s32.totalorder %s214, %s217
      %p226 = scmp.eq.s32.totalorder %s23, 1
      %p227 = por %p225, %p226
      %p228 = scmp.ne.s32.totalorder %s217, %s218
      %p229 = scmp.eq.s32.totalorder %s23, 0
      %p230 = por %p228, %p229
      %p231 = scmp.ne.s32.totalorder %s217, %s218
      %p232 = scmp.eq.s32.totalorder %s24, 1
      %p233 = por %p231, %p232
      %p235 = scmp.ne.s32.totalorder %s218, %s234
      %p236 = scmp.eq.s32.totalorder %s24, 0
      %p237 = por %p235, %p236
      %p238 = scmp.le.s32.totalorder 1, %s18
      %p239 = scmp.lt.s32.totalorder %s18, 3
      %p240 = pnand %p238, %p239
      %p241 = pneg %p240
      // Predicated region
      $region9: #{tpu_custom_call.1} parent=5 // pred_check
        _
      $region10: #{tpu_custom_call.1} parent=5 // pred_check_branch
        %243 = sbr.rel (%p240) target = $region12
      $region11: #{tpu_custom_call.1} parent=5 // pred_region
        %s244 = ssub.s32 %s18, 1
        // Predicated region
        $region13: #{tpu_custom_call.1} parent=11 // pred_check
          %p245 = pneg %p56
        $region14: #{tpu_custom_call.1} parent=11 // pred_check_branch
          %247 = sbr.rel (%p245) target = $region16
        $region15: #{tpu_custom_call.1} parent=11 // pred_region
          %s248 = smul.u32 2, %s27
          %p249 = scmp.lt.s32.totalorder %s248, 1
          %s250 = scalar_select %p249, %s248, 1
          %s251 = smul.addr %s250, 8
          %s252 = scalar_lea.vmem %s0, %s251
          %s253 = smul.u32 2, %s27
        $region16: #{tpu_custom_call.1} parent=11 // pred_fallthru
          _
        // Predicated region
        $region17: #{tpu_custom_call.1} parent=11 // pred_check
          %p254 = pneg %p82
        $region18: #{tpu_custom_call.1} parent=11 // pred_check_branch
          %256 = sbr.rel (%p254) target = $region20
        $region19: #{tpu_custom_call.1} parent=11 // pred_region
          %s257 = smul.u32 2, %s27
          %p258 = scmp.lt.s32.totalorder %s257, 1
          %s259 = scalar_select %p258, %s257, 1
          %s260 = smul.addr %s259, 8
          %s261 = scalar_lea.vmem %s1, %s260
          %s262 = smul.u32 2, %s27
        $region20: #{tpu_custom_call.1} parent=11 // pred_fallthru
          _
        // Predicated region
        $region21: #{tpu_custom_call.1} parent=11 // pred_check
          %p263 = pneg %p108
        $region22: #{tpu_custom_call.1} parent=11 // pred_check_branch
          %265 = sbr.rel (%p263) target = $region24
        $region23: #{tpu_custom_call.1} parent=11 // pred_region
          %s266 = smul.u32 2, %s27
          %s268 = ssub.s32 256, 256
          %269 = vsyncadd [#allocation4], %s268
          %s270 = smul.addr %s266, 128
          %s271 = scalar_lea.hbm %s2, %s270
          %s272 = sshll.u32 [#allocation3], 4
          %s273 = int_to_ptr.vmem [resolvable:$true] %s272
          %278 = dma.hbm_to_vmem [thread:$0]  %s271, 256, %s273, [#allocation4], 128, 128, 8
        $region24: #{tpu_custom_call.1} parent=11 // pred_fallthru
          _
        // Predicated region
        $region25: #{tpu_custom_call.1} parent=11 // pred_check
          %p279 = pneg %p129
        $region26: #{tpu_custom_call.1} parent=11 // pred_check_branch
          %281 = sbr.rel (%p279) target = $region28
        $region27: #{tpu_custom_call.1} parent=11 // pred_region
          %s283 = ssub.s32 1024, 1024
          %284 = vsyncadd [#allocation7], %s283
          %s285 = sshll.u32 [#allocation6], 4
          %s286 = int_to_ptr.vmem [resolvable:$true] %s285
          %291 = dma.hbm_to_vmem [thread:$0]  %s3, 1024, %s286, [#allocation7], 128, 128, 8
        $region28: #{tpu_custom_call.1} parent=11 // pred_fallthru
          _
        // Predicated region
        $region29: #{tpu_custom_call.1} parent=11 // pred_check
          %p292 = pneg %p150
        $region30: #{tpu_custom_call.1} parent=11 // pred_check_branch
          %294 = sbr.rel (%p292) target = $region32
        $region31: #{tpu_custom_call.1} parent=11 // pred_region
          _
        $region32: #{tpu_custom_call.1} parent=11 // pred_fallthru
          _
      $region12: #{tpu_custom_call.1} parent=5 // pred_fallthru
        _
      %p295 = scmp.lt.s32.totalorder %s18, 2
      // Predicated region
      $region33: #{tpu_custom_call.1} parent=5 // pred_check
        %p296 = pneg %p295
      $region34: #{tpu_custom_call.1} parent=5 // pred_check_branch
        %298 = sbr.rel (%p296) target = $region36
      $region35: #{tpu_custom_call.1} parent=5 // pred_region
        // Predicated region
        $region37: #{tpu_custom_call.1} parent=35 // pred_check
          %p299 = pneg %p170
        $region38: #{tpu_custom_call.1} parent=35 // pred_check_branch
          %301 = sbr.rel (%p299) target = $region40
        $region39: #{tpu_custom_call.1} parent=35 // pred_region
          %s302 = sand.u32 %s18, 1
          %s303 = scalar_lea.sflag [#allocation4], %s302
          %s304 = sand.u32 %s160, 1
          %s305 = smul.addr %s304, 256
          %s306 = scalar_lea.vmem [#allocation8], %s305
          %s307 = smul.u32 4, %s26
          %s309 = ssub.s32 4096, 4096
          %310 = vsyncadd %s303, %s309
          %s311 = smul.addr %s307, 64
          %s312 = scalar_lea.hbm %s5, %s311
          %s313 = sshll.u32 %s306, 4
          %s314 = int_to_ptr.vmem [resolvable:$true] %s313
          %319 = dma.hbm_to_vmem [thread:$0]  %s312, 4096, %s314, %s303, 512, 256, 16
        $region40: #{tpu_custom_call.1} parent=35 // pred_fallthru
          _
        // Predicated region
        $region41: #{tpu_custom_call.1} parent=35 // pred_check
          %p320 = pneg %p196
        $region42: #{tpu_custom_call.1} parent=35 // pred_check_branch
          %322 = sbr.rel (%p320) target = $region44
        $region43: #{tpu_custom_call.1} parent=35 // pred_region
          %s323 = smul.u32 4, %s26
          %p324 = scmp.lt.s32.totalorder %s323, 7
          %s325 = scalar_select %p324, %s323, 7
          %s326 = scalar_lea.vmem %s6, %s325
          %s327 = smul.u32 4, %s26
        $region44: #{tpu_custom_call.1} parent=35 // pred_fallthru
          _
      $region36: #{tpu_custom_call.1} parent=5 // pred_fallthru
        _
      %p328 = scmp.le.s32.totalorder 1, %s18
      %p329 = scmp.lt.s32.totalorder %s18, 3
      %p330 = pnand %p328, %p329
      %p331 = pneg %p330
      // Predicated region
      $region45: #{tpu_custom_call.1} parent=5 // pred_check
        _
      $region46: #{tpu_custom_call.1} parent=5 // pred_check_branch
        %333 = sbr.rel (%p330) target = $region48
      $region47: #{tpu_custom_call.1} parent=5 // pred_region
        %s334 = ssub.s32 %s18, 1
        // Predicated region
        $region49: #{tpu_custom_call.1} parent=47 // pred_check
          %p335 = pneg %p108
        $region50: #{tpu_custom_call.1} parent=47 // pred_check_branch
          %337 = sbr.rel (%p335) target = $region52
        $region51: #{tpu_custom_call.1} parent=47 // pred_region
          %338 = dma.done [#allocation4], 256
        $region52: #{tpu_custom_call.1} parent=47 // pred_fallthru
          _
        // Predicated region
        $region53: #{tpu_custom_call.1} parent=47 // pred_check
          %p339 = pneg %p129
        $region54: #{tpu_custom_call.1} parent=47 // pred_check_branch
          %341 = sbr.rel (%p339) target = $region56
        $region55: #{tpu_custom_call.1} parent=47 // pred_region
          %342 = dma.done [#allocation7], 1024
        $region56: #{tpu_custom_call.1} parent=47 // pred_fallthru
          _
        %s343 = sand.u32 %s23, 1
        %s344 = scalar_lea.sflag [#allocation4], %s343
        %s345 = sand.u32 %s163, 1
        %s346 = smul.addr %s345, 256
        %s347 = scalar_lea.vmem [#allocation8], %s346
        // Predicated region
        $region57: #{tpu_custom_call.1} parent=47 // pred_check
          %p348 = pneg %p176
        $region58: #{tpu_custom_call.1} parent=47 // pred_check_branch
          %350 = sbr.rel (%p348) target = $region60
        $region59: #{tpu_custom_call.1} parent=47 // pred_region
          %351 = dma.done %s344, 4096
        $region60: #{tpu_custom_call.1} parent=47 // pred_fallthru
          _
        %s352 = smul.u32 2, %s27
        %p353 = scmp.lt.s32.totalorder %s352, 1
        %s354 = scalar_select %p353, %s352, 1
        %s355 = smul.addr %s354, 8
        %s356 = scalar_lea.vmem %s0, %s355
        %p357 = pneg %p56
        %p358 = pneg %p53
        %s359 = smul.u32 2, %s27
        %p360 = scmp.lt.s32.totalorder %s359, 1
        %s361 = scalar_select %p360, %s359, 1
        %s362 = smul.addr %s361, 8
        %s363 = scalar_lea.vmem %s1, %s362
        %p364 = pneg %p82
        %p365 = pneg %p79
        %p366 = pneg %p108
        %p367 = pneg %p105
        %p368 = pneg %p129
        %p369 = pneg %p126
        %p370 = pneg %p150
        %p371 = pneg %p147
        %s372 = sand.u32 %s23, 1
        %s373 = scalar_lea.sflag [#allocation4], %s372
        %s374 = sand.u32 %s163, 1
        %s375 = smul.addr %s374, 256
        %s376 = scalar_lea.vmem [#allocation8], %s375
        %p377 = pneg %p176
        %p378 = pneg %p173
        %s379 = smul.u32 4, %s28
        %p380 = scmp.lt.s32.totalorder %s379, 7
        %s381 = scalar_select %p380, %s379, 7
        %s382 = scalar_lea.vmem %s6, %s381
        %p383 = pneg %p202
        %p384 = pneg %p199
        %p385 = pneg %p230
        %p386 = pneg %p227
        %s387 = sand.u32 %s217, 1
        %s388 = scalar_lea.sflag [#allocation5], %s387
        %s389 = sand.u32 %s217, 1
        %s390 = smul.addr %s389, 64
        %s391 = scalar_lea.vmem [#allocation9], %s390
        %s392 = smul.u32 2, %s27
        %p393 = scmp.lt.s32.totalorder %s392, 1
        %s394 = scalar_select %p393, %s392, 1
        %s395 = smul.addr %s394, 8
        %s396 = scalar_lea.vmem %s0, %s395
        %s397 = smul.u32 2, %s27
        %s398 = smul.u32 2, %s27
        %p399 = scmp.lt.s32.totalorder %s398, 1
        %s400 = scalar_select %p399, %s398, 1
        %s401 = smul.addr %s400, 8
        %s402 = scalar_lea.vmem %s1, %s401
        %s403 = smul.u32 2, %s27
        %s404 = smul.u32 2, %s27
        %s405 = smul.u32 4, %s28
        %s406 = smul.u32 4, %s28
        %p407 = scmp.lt.s32.totalorder %s406, 7
        %s408 = scalar_select %p407, %s406, 7
        %s409 = scalar_lea.vmem %s6, %s408
        %s410 = smul.u32 4, %s28
        %s411 = smul.u32 2, %s27
        %s412 = smul.u32 4, %s28
        %p414 = scmp.eq.s32.totalorder %s28, 0
        // Predicated region
        $region61: #{tpu_custom_call.1} parent=47 // pred_check
          %p415 = pneg %p414
        $region62: #{tpu_custom_call.1} parent=47 // pred_check_branch
          %417 = sbr.rel (%p415) target = $region64
        $region63: #{tpu_custom_call.1} parent=47 // pred_region
          %v418 = vld [vmem:[#allocation3] sm:$0xff]
          %v419 = vld [vmem:[#allocation3 + $0x8] sm:$0xff]
          %v420 = vld [vmem:[#allocation6] sm:$0xff]
          %v421 = vld [vmem:[#allocation6 + $0x8] sm:$0xff]
          %v422 = vld [vmem:[#allocation6 + $0x10] sm:$0xff]
          %v423 = vld [vmem:[#allocation6 + $0x18] sm:$0xff]
          %v424 = vld [vmem:[#allocation6 + $0x20] sm:$0xff]
          %v425 = vld [vmem:[#allocation6 + $0x28] sm:$0xff]
          %v426 = vld [vmem:[#allocation6 + $0x30] sm:$0xff]
          %v427 = vld [vmem:[#allocation6 + $0x38] sm:$0xff]
          %v428 = vld [vmem:[%s4] sm:$0x1]
          %v430 = vlaneseq
          %v431 = vshrl.u32 %v430, 7
          %v432 = vsub.s32 0, %v431
          %v433 = vrot.slane %v428, %v432
          %vm435 = vcmask 523264
          %v437 = vsel %vm435, %v418, 0
          %v440 = vsel %vm435, %v419, 0
          %442 = vmatprep.subr.mxu0 0.0
          %443 = vmatpush1.msra.mxu0 %v420
          %444 = vmatprep.subr.mxu0 0.0
          %445 = vmatpush1.msra.mxu0 %v421
          %446 = vmatprep.subr.mxu0 0.0
          %447 = vmatpush1.msra.mxu0 %v422
          %448 = vmatprep.subr.mxu0 0.0
          %449 = vmatpush1.msra.mxu0 %v423
          %450 = vmatprep.subr.mxu0 0.0
          %451 = vmatpush1.msra.mxu0 %v424
          %452 = vmatprep.subr.mxu0 0.0
          %453 = vmatpush1.msra.mxu0 %v425
          %454 = vmatprep.subr.mxu0 0.0
          %455 = vmatpush1.msra.mxu0 %v426
          %456 = vmatprep.subr.mxu0 0.0
          %457 = vmatpush1.msra.mxu0 %v427
          %458 = vmatprep.subr.mxu0 0.0
          %459 = vmatpush1.msra.mxu0 0.0
          %460 = vmatprep.subr.mxu0 0.0
          %461 = vmatpush1.msra.mxu0 0.0
          %462 = vmatprep.subr.mxu0 0.0
          %463 = vmatpush1.msra.mxu0 0.0
          %464 = vmatprep.subr.mxu0 0.0
          %465 = vmatpush1.msra.mxu0 0.0
          %466 = vmatprep.subr.mxu0 0.0
          %467 = vmatpush1.msra.mxu0 0.0
          %468 = vmatprep.subr.mxu0 0.0
          %469 = vmatpush1.msra.mxu0 0.0
          %470 = vmatprep.subr.mxu0 0.0
          %471 = vmatpush1.msra.mxu0 0.0
          %472 = vmatprep.subr.mxu0 0.0
          %473 = vmatpush1.msra.mxu0 0.0
          %474 = vmatprep.subr.mxu0 0.0
          %475 = vmatpush1.msra.mxu0 0.0
          %476 = vmatprep.subr.mxu0 0.0
          %477 = vmatpush1.msra.mxu0 0.0
          %478 = vmatprep.subr.mxu0 0.0
          %479 = vmatpush1.msra.mxu0 0.0
          %480 = vmatprep.subr.mxu0 0.0
          %481 = vmatpush1.msra.mxu0 0.0
          %482 = vmatprep.subr.mxu0 0.0
          %483 = vmatpush1.msra.mxu0 0.0
          %484 = vmatprep.subr.mxu0 0.0
          %485 = vmatpush1.msra.mxu0 0.0
          %486 = vmatprep.subr.mxu0 0.0
          %487 = vmatpush1.msra.mxu0 0.0
          %488 = vmatprep.subr.mxu0 0.0
          %489 = vmatpush1.msra.mxu0 0.0
          %490 = vmatprep.subr.mxu0 0.0
          %491 = vmatpush1.msra.mxu0 0.0
          %492 = vmatprep.subr.mxu0 0.0
          %493 = vmatpush1.msra.mxu0 0.0
          %494 = vmatprep.subr.mxu0 0.0
          %495 = vmatpush1.msra.mxu0 0.0
          %496 = vmatprep.subr.mxu0 0.0
          %497 = vmatpush1.msra.mxu0 0.0
          %498 = vmatprep.subr.mxu0 0.0
          %499 = vmatpush1.msra.mxu0 0.0
          %500 = vmatprep.subr.mxu0 0.0
          %501 = vmatpush1.msra.mxu0 0.0
          %502 = vmatprep.subr.mxu0 0.0
          %503 = vmatpush1.msra.mxu0 0.0
          %504 = vmatprep.subr.mxu0 0.0
          %505 = vmatpush1.msra.mxu0 0.0
          %506 = vmatprep.mubr.f32.mxu0 0.0
          %507 = vmatmul.mubr.f32.gmra.mrb[0].mxu0 %v437
          %v508 = vpop.f32.mrb[0].mxu0
          %v509 = vadd.f32 %v433, %v508
          %v510 = vpop.f32.mrb[0].mxu0
          %511 = vmatprep.mubr.f32.mxu0 0.0
          %512 = vmatmul.mubr.f32.gmra.mrb[0].mxu0 %v440
          %v513 = vpop.f32.mrb[0].mxu0
          %v514 = vadd.f32 %v433, %v513
          %v515 = vpop.f32.mrb[0].mxu0
          %516 = vdwg.mxu0
          %v517 = vld [vmem:[%s402] sm:$0xff]
          %v518 = vld [vmem:[%s402 + $0x8] sm:$0xff]
          %v519 = vld [vmem:[%s396] sm:$0xff]
          %v520 = vld [vmem:[%s396 + $0x8] sm:$0xff]
          %522 = vset.pattern.permute.xlu0 0
          %523 = vperm.xlu0 %522, %v519
          %v524 = vpop.permute.xlu0 %523
          %527 = vset.pattern.permute.xlu0 0
          %528 = vperm.xlu0 %527, %v520
          %v529 = vpop.permute.xlu0 %528
          %v531 = vmul.f32 %v509, %v524
          %v532 = vmul.f32 %v514, %v529
          %v533 = vadd.f32 %v517, %v531
          %v534 = vadd.f32 %v518, %v532
          %v535 = vpack.c.bf16 %v534, %v533
          %536 = vst [vmem:[#allocation2] sm:$0xff] %v535
        $region64: #{tpu_custom_call.1} parent=47 // pred_fallthru
          _
        %v537 = vld [vmem:[#allocation2] sm:$0xff]
        %v538 = vld [vmem:[%s347] sm:$0xff]
        %v539 = vld [vmem:[%s347 + $0x8] sm:$0xff]
        %v540 = vld [vmem:[%s347 + $0x10] sm:$0xff]
        %v541 = vld [vmem:[%s347 + $0x18] sm:$0xff]
        %v542 = vld [vmem:[%s347 + $0x20] sm:$0xff]
        %v543 = vld [vmem:[%s347 + $0x28] sm:$0xff]
        %v544 = vld [vmem:[%s347 + $0x30] sm:$0xff]
        %v545 = vld [vmem:[%s347 + $0x38] sm:$0xff]
        %v546 = vld [vmem:[%s347 + $0x40] sm:$0xff]
        %v547 = vld [vmem:[%s347 + $0x48] sm:$0xff]
        %v548 = vld [vmem:[%s347 + $0x50] sm:$0xff]
        %v549 = vld [vmem:[%s347 + $0x58] sm:$0xff]
        %v550 = vld [vmem:[%s347 + $0x60] sm:$0xff]
        %v551 = vld [vmem:[%s347 + $0x68] sm:$0xff]
        %v552 = vld [vmem:[%s347 + $0x70] sm:$0xff]
        %v553 = vld [vmem:[%s347 + $0x78] sm:$0xff]
        %v554 = vld [vmem:[%s347 + $0x80] sm:$0xff]
        %v555 = vld [vmem:[%s347 + $0x88] sm:$0xff]
        %v556 = vld [vmem:[%s347 + $0x90] sm:$0xff]
        %v557 = vld [vmem:[%s347 + $0x98] sm:$0xff]
        %v558 = vld [vmem:[%s347 + $0xa0] sm:$0xff]
        %v559 = vld [vmem:[%s347 + $0xa8] sm:$0xff]
        %v560 = vld [vmem:[%s347 + $0xb0] sm:$0xff]
        %v561 = vld [vmem:[%s347 + $0xb8] sm:$0xff]
        %v562 = vld [vmem:[%s347 + $0xc0] sm:$0xff]
        %v563 = vld [vmem:[%s347 + $0xc8] sm:$0xff]
        %v564 = vld [vmem:[%s347 + $0xd0] sm:$0xff]
        %v565 = vld [vmem:[%s347 + $0xd8] sm:$0xff]
        %v566 = vld [vmem:[%s347 + $0xe0] sm:$0xff]
        %v567 = vld [vmem:[%s347 + $0xe8] sm:$0xff]
        %v568 = vld [vmem:[%s347 + $0xf0] sm:$0xff]
        %v569 = vld [vmem:[%s347 + $0xf8] sm:$0xff]
        %v570 = vld [vmem:[%s409] sm:$0xf]
        %v572 = vlaneseq
        %v573 = vshrl.u32 %v572, 7
        %v574 = vsub.s32 0, %v573
        %v575 = vrot.slane %v570, %v574
        %v576 = vlaneseq
        %v577 = vshrl.u32 %v576, 7
        %v578 = vsub.s32 1, %v577
        %v579 = vrot.slane %v570, %v578
        %v580 = vlaneseq
        %v581 = vshrl.u32 %v580, 7
        %v582 = vsub.s32 2, %v581
        %v583 = vrot.slane %v570, %v582
        %v584 = vlaneseq
        %v585 = vshrl.u32 %v584, 7
        %v586 = vsub.s32 3, %v585
        %v587 = vrot.slane %v570, %v586
        %v624 = vunpack.c.l.b16 %v538
        %v625 = vunpack.c.h.b16 %v538
        %v626 = vunpack.c.l.b16 %v539
        %v627 = vunpack.c.h.b16 %v539
        %v628 = vunpack.c.l.b16 %v540
        %v629 = vunpack.c.h.b16 %v540
        %v630 = vunpack.c.l.b16 %v541
        %v631 = vunpack.c.h.b16 %v541
        %v632 = vunpack.c.l.b16 %v542
        %v633 = vunpack.c.h.b16 %v542
        %v634 = vunpack.c.l.b16 %v543
        %v635 = vunpack.c.h.b16 %v543
        %v636 = vunpack.c.l.b16 %v544
        %v637 = vunpack.c.h.b16 %v544
        %v638 = vunpack.c.l.b16 %v545
        %v639 = vunpack.c.h.b16 %v545
        %v640 = vunpack.c.l.b16 %v546
        %v641 = vunpack.c.h.b16 %v546
        %v642 = vunpack.c.l.b16 %v547
        %v643 = vunpack.c.h.b16 %v547
        %v644 = vunpack.c.l.b16 %v548
        %v645 = vunpack.c.h.b16 %v548
        %v646 = vunpack.c.l.b16 %v549
        %v647 = vunpack.c.h.b16 %v549
        %v648 = vunpack.c.l.b16 %v550
        %v649 = vunpack.c.h.b16 %v550
        %v650 = vunpack.c.l.b16 %v551
        %v651 = vunpack.c.h.b16 %v551
        %v652 = vunpack.c.l.b16 %v552
        %v653 = vunpack.c.h.b16 %v552
        %v654 = vunpack.c.l.b16 %v553
        %v655 = vunpack.c.h.b16 %v553
        %v656 = vunpack.c.l.b16 %v554
        %v657 = vunpack.c.h.b16 %v554
        %v658 = vunpack.c.l.b16 %v555
        %v659 = vunpack.c.h.b16 %v555
        %v660 = vunpack.c.l.b16 %v556
        %v661 = vunpack.c.h.b16 %v556
        %v662 = vunpack.c.l.b16 %v557
        %v663 = vunpack.c.h.b16 %v557
        %v664 = vunpack.c.l.b16 %v558
        %v665 = vunpack.c.h.b16 %v558
        %v666 = vunpack.c.l.b16 %v559
        %v667 = vunpack.c.h.b16 %v559
        %v668 = vunpack.c.l.b16 %v560
        %v669 = vunpack.c.h.b16 %v560
        %v670 = vunpack.c.l.b16 %v561
        %v671 = vunpack.c.h.b16 %v561
        %v672 = vunpack.c.l.b16 %v562
        %v673 = vunpack.c.h.b16 %v562
        %v674 = vunpack.c.l.b16 %v563
        %v675 = vunpack.c.h.b16 %v563
        %v676 = vunpack.c.l.b16 %v564
        %v677 = vunpack.c.h.b16 %v564
        %v678 = vunpack.c.l.b16 %v565
        %v679 = vunpack.c.h.b16 %v565
        %v680 = vunpack.c.l.b16 %v566
        %v681 = vunpack.c.h.b16 %v566
        %v682 = vunpack.c.l.b16 %v567
        %v683 = vunpack.c.h.b16 %v567
        %v684 = vunpack.c.l.b16 %v568
        %v685 = vunpack.c.h.b16 %v568
        %v686 = vunpack.c.l.b16 %v569
        %v687 = vunpack.c.h.b16 %v569
        %v688 = vpack.c.b16 %v628, %v624
        %v689 = vpack.c.b16 %v629, %v625
        %v690 = vpack.c.b16 %v630, %v626
        %v691 = vpack.c.b16 %v631, %v627
        %v692 = vpack.c.b16 %v636, %v632
        %v693 = vpack.c.b16 %v637, %v633
        %v694 = vpack.c.b16 %v638, %v634
        %v695 = vpack.c.b16 %v639, %v635
        %v696 = vpack.c.b16 %v644, %v640
        %v697 = vpack.c.b16 %v645, %v641
        %v698 = vpack.c.b16 %v646, %v642
        %v699 = vpack.c.b16 %v647, %v643
        %v700 = vpack.c.b16 %v652, %v648
        %v701 = vpack.c.b16 %v653, %v649
        %v702 = vpack.c.b16 %v654, %v650
        %v703 = vpack.c.b16 %v655, %v651
        %v704 = vpack.c.b16 %v660, %v656
        %v705 = vpack.c.b16 %v661, %v657
        %v706 = vpack.c.b16 %v662, %v658
        %v707 = vpack.c.b16 %v663, %v659
        %v708 = vpack.c.b16 %v668, %v664
        %v709 = vpack.c.b16 %v669, %v665
        %v710 = vpack.c.b16 %v670, %v666
        %v711 = vpack.c.b16 %v671, %v667
        %v712 = vpack.c.b16 %v676, %v672
        %v713 = vpack.c.b16 %v677, %v673
        %v714 = vpack.c.b16 %v678, %v674
        %v715 = vpack.c.b16 %v679, %v675
        %v716 = vpack.c.b16 %v684, %v680
        %v717 = vpack.c.b16 %v685, %v681
        %v718 = vpack.c.b16 %v686, %v682
        %v719 = vpack.c.b16 %v687, %v683
        %752 = vmatprep.subr.bf16.mxu0 %v689
        %753 = vmatpush1.bf16.msra.mxu0 %v688
        %754 = vmatprep.subr.bf16.mxu0 %v693
        %755 = vmatpush1.bf16.msra.mxu0 %v692
        %756 = vmatprep.subr.bf16.mxu0 %v697
        %757 = vmatpush1.bf16.msra.mxu0 %v696
        %758 = vmatprep.subr.bf16.mxu0 %v701
        %759 = vmatpush1.bf16.msra.mxu0 %v700
        %760 = vmatprep.subr.bf16.mxu0 %v705
        %761 = vmatpush1.bf16.msra.mxu0 %v704
        %762 = vmatprep.subr.bf16.mxu0 %v709
        %763 = vmatpush1.bf16.msra.mxu0 %v708
        %764 = vmatprep.subr.bf16.mxu0 %v713
        %765 = vmatpush1.bf16.msra.mxu0 %v712
        %766 = vmatprep.subr.bf16.mxu0 %v717
        %767 = vmatpush1.bf16.msra.mxu0 %v716
        %768 = vmatprep.subr.bf16.mxu0 0
        %769 = vmatpush1.bf16.msra.mxu0 0
        %770 = vmatprep.subr.bf16.mxu0 0
        %771 = vmatpush1.bf16.msra.mxu0 0
        %772 = vmatprep.subr.bf16.mxu0 0
        %773 = vmatpush1.bf16.msra.mxu0 0
        %774 = vmatprep.subr.bf16.mxu0 0
        %775 = vmatpush1.bf16.msra.mxu0 0
        %776 = vmatprep.subr.bf16.mxu0 0
        %777 = vmatpush1.bf16.msra.mxu0 0
        %778 = vmatprep.subr.bf16.mxu0 0
        %779 = vmatpush1.bf16.msra.mxu0 0
        %780 = vmatprep.subr.bf16.mxu0 0
        %781 = vmatpush1.bf16.msra.mxu0 0
        %782 = vmatprep.subr.bf16.mxu0 0
        %783 = vmatpush1.bf16.msra.mxu0 0
        %784 = vmatprep.mubr.bf16.mxu0 0
        %785 = vmatmul.mubr.bf16.gmra.mrb[0].mxu0 %v537
        %v786 = vpop.f32.mrb[0].mxu0
        %v787 = vadd.f32 %v575, %v786
        %v788 = vpop.f32.mrb[0].mxu0
        %v789 = vadd.f32 %v579, %v788
        %v790 = vpop.f32.mrb[0].mxu0
        %v791 = vadd.f32 %v575, %v790
        %v792 = vpop.f32.mrb[0].mxu0
        %v793 = vadd.f32 %v579, %v792
        %794 = vdwg.mxu0
        %795 = vmatprep.subr.bf16.mxu0 %v691
        %796 = vmatpush1.bf16.msra.mxu0 %v690
        %797 = vmatprep.subr.bf16.mxu0 %v695
        %798 = vmatpush1.bf16.msra.mxu0 %v694
        %799 = vmatprep.subr.bf16.mxu0 %v699
        %800 = vmatpush1.bf16.msra.mxu0 %v698
        %801 = vmatprep.subr.bf16.mxu0 %v703
        %802 = vmatpush1.bf16.msra.mxu0 %v702
        %803 = vmatprep.subr.bf16.mxu0 %v707
        %804 = vmatpush1.bf16.msra.mxu0 %v706
        %805 = vmatprep.subr.bf16.mxu0 %v711
        %806 = vmatpush1.bf16.msra.mxu0 %v710
        %807 = vmatprep.subr.bf16.mxu0 %v715
        %808 = vmatpush1.bf16.msra.mxu0 %v714
        %809 = vmatprep.subr.bf16.mxu0 %v719
        %810 = vmatpush1.bf16.msra.mxu0 %v718
        %811 = vmatprep.subr.bf16.mxu0 0
        %812 = vmatpush1.bf16.msra.mxu0 0
        %813 = vmatprep.subr.bf16.mxu0 0
        %814 = vmatpush1.bf16.msra.mxu0 0
        %815 = vmatprep.subr.bf16.mxu0 0
        %816 = vmatpush1.bf16.msra.mxu0 0
        %817 = vmatprep.subr.bf16.mxu0 0
        %818 = vmatpush1.bf16.msra.mxu0 0
        %819 = vmatprep.subr.bf16.mxu0 0
        %820 = vmatpush1.bf16.msra.mxu0 0
        %821 = vmatprep.subr.bf16.mxu0 0
        %822 = vmatpush1.bf16.msra.mxu0 0
        %823 = vmatprep.subr.bf16.mxu0 0
        %824 = vmatpush1.bf16.msra.mxu0 0
        %825 = vmatprep.subr.bf16.mxu0 0
        %826 = vmatpush1.bf16.msra.mxu0 0
        %827 = vmatprep.mubr.bf16.mxu0 0
        %828 = vmatmul.mubr.bf16.gmra.mrb[0].mxu0 %v537
        %v829 = vpop.f32.mrb[0].mxu0
        %v830 = vadd.f32 %v583, %v829
        %v831 = vpop.f32.mrb[0].mxu0
        %v832 = vadd.f32 %v587, %v831
        %v833 = vpop.f32.mrb[0].mxu0
        %v834 = vadd.f32 %v583, %v833
        %v835 = vpop.f32.mrb[0].mxu0
        %v836 = vadd.f32 %v587, %v835
        %837 = vdwg.mxu0
        %838 = vst [vmem:[%s391] sm:$0xff] %v787
        %839 = vst [vmem:[%s391 + $0x8] sm:$0xff] %v789
        %840 = vst [vmem:[%s391 + $0x10] sm:$0xff] %v830
        %841 = vst [vmem:[%s391 + $0x18] sm:$0xff] %v832
        %842 = vst [vmem:[%s391 + $0x20] sm:$0xff] %v791
        %843 = vst [vmem:[%s391 + $0x28] sm:$0xff] %v793
        %844 = vst [vmem:[%s391 + $0x30] sm:$0xff] %v834
        %845 = vst [vmem:[%s391 + $0x38] sm:$0xff] %v836
        %s846 = sand.u32 %s217, 1
        %s847 = scalar_lea.sflag [#allocation5], %s846
        %s848 = sand.u32 %s217, 1
        %s849 = smul.addr %s848, 64
        %s850 = scalar_lea.vmem [#allocation9], %s849
        // Predicated region
        $region65: #{tpu_custom_call.1} parent=47 // pred_check
          %p851 = pneg %p227
        $region66: #{tpu_custom_call.1} parent=47 // pred_check_branch
          %853 = sbr.rel (%p851) target = $region68
        $region67: #{tpu_custom_call.1} parent=47 // pred_region
          %s854 = smul.u32 2, %s27
          %s855 = smul.u32 4, %s28
          %s857 = ssub.s32 1024, 1024
          %858 = vsyncadd %s847, %s857
          %s859 = smul.addr %s854, 8
          %s860 = sadd.s32 %s855, %s859
          %s861 = smul.addr %s860, 128
          %s862 = scalar_lea.hbm %s7, %s861
          %s863 = sshll.u32 %s850, 4
          %s864 = int_to_ptr.vmem [resolvable:$true] %s863
          %869 = dma.vmem_to_hbm [thread:$0]  %s864, 1024, %s862, %s847, 512, 1024, 32
        $region68: #{tpu_custom_call.1} parent=47 // pred_fallthru
          _
      $region48: #{tpu_custom_call.1} parent=5 // pred_fallthru
        _
      %p870 = scmp.le.s32.totalorder 2, %s18
      // Predicated region
      $region69: #{tpu_custom_call.1} parent=5 // pred_check
        %p871 = pneg %p870
      $region70: #{tpu_custom_call.1} parent=5 // pred_check_branch
        %873 = sbr.rel (%p871) target = $region72
      $region71: #{tpu_custom_call.1} parent=5 // pred_region
        %s874 = ssub.s32 %s18, 2
        // Predicated region
        $region73: #{tpu_custom_call.1} parent=71 // pred_check
          %p875 = pneg %p233
        $region74: #{tpu_custom_call.1} parent=71 // pred_check_branch
          %877 = sbr.rel (%p875) target = $region76
        $region75: #{tpu_custom_call.1} parent=71 // pred_region
          %s878 = sand.u32 %s218, 1
          %s879 = scalar_lea.sflag [#allocation5], %s878
          %s880 = sand.u32 %s218, 1
          %s881 = smul.addr %s880, 64
          %s882 = scalar_lea.vmem [#allocation9], %s881
          %883 = dma.done %s879, 1024
        $region76: #{tpu_custom_call.1} parent=71 // pred_fallthru
          _
      $region72: #{tpu_custom_call.1} parent=5 // pred_fallthru
        _
    $region6: #{tpu_custom_call.1} parent=1 // loop_footer
      %s22 = sadd.s32 1, %s18
    $region7: #{tpu_custom_call.1} parent=1 // loop_footer_branch
      %17 = sbr.rel target = $region3
    $region8: #{tpu_custom_call.1} parent=1 // loop_exit
      _
    %884 = vsyncpa [#allocation4], 1
    %s885 = scalar_lea.sflag [#allocation4], 1
    %886 = vsyncpa %s885, 1
    %887 = vsyncpa [#allocation7], 1
    %888 = vsyncpa [#allocation5], 1
    %s889 = scalar_lea.sflag [#allocation5], 1
    %890 = vsyncpa %s889, 1

</llo_original>
